<compile_context>
chip_gen: v5e
topology: v5e:2x2
jax: 0.10.0
libtpu: 0.0.40
codegen_flags: <defaults>
</compile_context>

<pallas_src>
import functools

import jax
import jax.numpy as jnp
from jax import lax
from jax.experimental import pallas as pl
from jax.experimental.pallas import tpu as pltpu


def _round_up(x, m):
    return ((x + m - 1) // m) * m


def _cdiv(a, b):
    return (a + b - 1) // b


def _vmem_budget_bytes():
    """Generation-aware VMEM budget: v7x has 64 MiB/TC, v5e/v6e have 128 MiB."""
    cap = None
    try:
        cap = int(pltpu.get_tpu_info().vmem_capacity_bytes)
    except Exception:
        cap = None
    if cap is None:
        kind = (getattr(jax.devices()[0], "device_kind", "") or "").lower()
        cap = 64 * 1024 * 1024 if "v7" in kind else 128 * 1024 * 1024
    if cap <= 64 * 1024 * 1024:
        return 44 * 1024 * 1024          # v7x: leave headroom under 64 MiB
    return 100 * 1024 * 1024             # v5e / v6e: 128 MiB physical


def _pick_tile_m(m, k, d, budget_bytes):
    """Largest 8-aligned TM whose per-tile working set fits the VMEM budget."""
    d_pad = _round_up(d, 128)            # lane padding of (TM, D) VMEM buffers
    k_pad = _round_up(k, 128)
    # Resident constant blocks (codebook hi/lo bf16 + 0.5*||e||^2), counted
    # with the pipeline's 2 buffers each, plus slack for compiler scratch.
    codebook_buf = _round_up(k, 8) * d_pad * 2           # one bf16 copy
    e2_buf = 8 * k_pad * 4
    const = 2 * (2 * codebook_buf) + 2 * e2_buf + (2 << 20)
    avail = max(budget_bytes - const, 1 << 20)
    per_row = (
        2 * 4 * d_pad        # x tile   (f32, double-buffered)
        + 2 * 4 * d_pad      # q tile   (f32, double-buffered)
        + 2 * 4              # idx tile (int32, lane-dense, double-buffered)
        + 4 * k_pad          # score (TM, K) f32 temporary
        + 4 * k_pad          # one-hot f32 temporary
        + 2 * k_pad          # one-hot bf16 temporary
        + 2 * d_pad          # x bf16 temporary
        + 4 * d_pad          # q f32 temporary
    )
    tm = int(avail // per_row)
    tm = max(8, min((tm // 8) * 8, 4096))
    # Keep the grid >= 2 tiles so both v7x TensorCores get work
    # (harmless extra grid step on single-TC v5e / v6e).
    tm = min(tm, max(8, _round_up(_cdiv(m, 2), 8)))
    return tm


def _vq_kernel(m_valid, tile_m, x_ref, ehi_ref, elo_ref, e2h_ref,
               q_ref, idx_ref, loss_ref, encsum_ref):
    """One M-tile of the VQ forward.

    x_ref     : (TM, D) f32   flat input tile
    ehi_ref   : (K, D)  bf16  codebook high bits (resident across grid steps)
    elo_ref   : (K, D)  bf16  codebook residual (e - f32(e_hi)) in bf16
    e2h_ref   : (1, K)  f32   precomputed 0.5 * ||e||^2
    q_ref     : (TM, D) f32   quantized tile
    idx_ref   : (1,1,TM) i32  argmin codebook index per row (lane-dense)
    loss_ref  : (1,1,1) f32   per-tile sum of (q - x)^2 over valid rows
    encsum_ref: (1,1,K) f32   per-tile column-sum of one-hot over valid rows
    """
    x = x_ref[...]                                            # (TM, D) f32

    # argmin_k ||x - e_k||^2 == argmax_k ( x.e_k - 0.5*||e_k||^2 )
    # (the row-constant ||x||^2 and the factor 2 never change the argmin).
    xe = lax.dot_general(
        x.astype(jnp.bfloat16), ehi_ref[...],
        (((1,), (1,)), ((), ())),
        preferred_element_type=jnp.float32)                   # (TM, K)
    score = xe - e2h_ref[...]
    idx = jnp.argmax(score, axis=1).astype(jnp.int32)         # (TM,)

    col = lax.broadcasted_iota(jnp.int32, score.shape, 1)     # (TM, K)
    enc_f = (col == idx[:, None]).astype(jnp.float32)         # one-hot, f32
    enc_b = enc_f.astype(jnp.bfloat16)                        # exact 0/1 in bf16

    # quantized = one-hot @ codebook as an exact two-pass bf16 MXU matmul:
    # each row is exactly e_hi[idx] + e_lo[idx] in f32.
    q = (jnp.dot(enc_b, ehi_ref[...], preferred_element_type=jnp.float32)
         + jnp.dot(enc_b, elo_ref[...], preferred_element_type=jnp.float32))

    q_ref[...] = q
    idx_ref[...] = idx[None, None, :]

    # Per-tile partial reductions; mask rows past M on the ragged tail tile.
    if m_valid % tile_m != 0:
        row0 = pl.program_id(0) * tile_m
        rid = row0 + lax.broadcasted_iota(jnp.int32, (tile_m, 1), 0)
        valid = rid < m_valid                                 # (TM, 1) bool
        diff = jnp.where(valid, q - x, 0.0)
        enc_m = jnp.where(valid, enc_f, 0.0)
    else:
        diff = q - x
        enc_m = enc_f

    loss_ref[...] = jnp.sum(diff * diff).reshape(1, 1, 1)
    encsum_ref[...] = jnp.sum(enc_m, axis=0)[None, None, :]


def vector_quantizer_ema_forward(inputs, embedding_weight, commitment_cost,
                                 *, tile_m=None, return_indices=False):
    """Eval-mode forward of VectorQuantizerEMA.

    Args:
      inputs: (B, N, D) continuous latents (channel-last), D == embedding_dim.
      embedding_weight: (K, D) codebook.
      commitment_cost: python float.
      tile_m: optional override of the rows-per-grid-step tile size.
      return_indices: mirror the PyTorch flag: return (quantized, indices).

    Returns:
      (loss, quantized, perplexity, encodings) matching the PyTorch forward,
      or (quantized, indices) if return_indices.  Eval-only: no custom VJP.
    """
    inputs = inputs.astype(jnp.float32)
    input_shape = inputs.shape
    K, D = embedding_weight.shape
    flat = inputs.reshape(-1, D)
    M = flat.shape[0]

    budget = _vmem_budget_bytes()
    tm = int(tile_m) if tile_m is not None else _pick_tile_m(M, K, D, budget)
    tm = max(8, (tm // 8) * 8)
    grid = _cdiv(M, tm)

    # Single codebook stream: exact bf16 hi/lo split + hoisted 0.5*||e||^2.
    e_f32 = embedding_weight.astype(jnp.float32)
    e_hi = e_f32.astype(jnp.bfloat16)
    e_lo = (e_f32 - e_hi.astype(jnp.float32)).astype(jnp.bfloat16)
    e2h = 0.5 * jnp.sum(e_f32 * e_f32, axis=1).reshape(1, K)

    kernel = functools.partial(_vq_kernel, M, tm)

    out_shapes = (
        jax.ShapeDtypeStruct((M, D), jnp.float32),        # quantized (flat)
        jax.ShapeDtypeStruct((grid, 1, tm), jnp.int32),   # argmin indices
        jax.ShapeDtypeStruct((grid, 1, 1), jnp.float32),  # per-tile loss parts
        jax.ShapeDtypeStruct((grid, 1, K), jnp.float32),  # per-tile enc sums
    )

    grid_spec = pl.GridSpec(
        grid=(grid,),
        in_specs=[
            pl.BlockSpec((tm, D), lambda i: (i, 0)),      # x tile (pipelined)
            pl.BlockSpec((K, D), lambda i: (0, 0)),       # codebook hi (resident)
            pl.BlockSpec((K, D), lambda i: (0, 0)),       # codebook lo (resident)
            pl.BlockSpec((1, K), lambda i: (0, 0)),       # 0.5*||e||^2 (resident)
        ],
        out_specs=[
            pl.BlockSpec((tm, D), lambda i: (i, 0)),
            pl.BlockSpec((1, 1, tm), lambda i: (i, 0, 0)),
            pl.BlockSpec((1, 1, 1), lambda i: (i, 0, 0)),
            pl.BlockSpec((1, 1, K), lambda i: (i, 0, 0)),
        ],
    )

    q_flat, idx_tiles, loss_parts, enc_sums = pl.pallas_call(
        kernel,
        out_shape=out_shapes,
        grid_spec=grid_spec,
        compiler_params=pltpu.CompilerParams(
            dimension_semantics=("parallel",),
            vmem_limit_bytes=budget),
    )(flat, e_hi, e_lo, e2h)

    indices = idx_tiles.reshape(-1)[:M]                       # (M,) int32 (tiny)

    # Global reductions finished in the wrapper (a few hundred FLOPs).
    e_latent_loss = jnp.sum(loss_parts) / (M * D)             # mse over M*D elems
    loss = commitment_cost * e_latent_loss

    avg_probs = jnp.sum(enc_sums, axis=(0, 1)) / M            # (K,)
    perplexity = jnp.exp(-jnp.sum(avg_probs * jnp.log(avg_probs + 1e-10)))

    quantized = q_flat.reshape(input_shape)
    # Straight-through estimator (identical values in the forward pass).
    quantized = inputs + lax.stop_gradient(quantized - inputs)

    if return_indices:
        return quantized, indices.reshape(input_shape[0], -1)

    # Dense f32 one-hot only materialized here (the module returns it); the
    # kernel itself never writes the (M, K) matrix to HBM.
    encodings = jax.nn.one_hot(indices, K, dtype=jnp.float32)
    return loss, quantized, perplexity, encodings


if __name__ == "__main__":
    # Module hyperparameters (synthetic, deterministic init).
    num_embeddings = 128
    embedding_dim = 32
    commitment_cost = 0.25

    key = jax.random.PRNGKey(0)
    k_in, k_emb = jax.random.split(key)

    # Small input: batch=2, seq=8, hidden=embedding_dim=32  -> flat (16, 32)
    inputs = jax.random.normal(k_in, (2, 8, embedding_dim), dtype=jnp.float32)
    # nn.Embedding weight ~ N(0, 1), shape (num_embeddings, embedding_dim)
    embedding_weight = jax.random.normal(
        k_emb, (num_embeddings, embedding_dim), dtype=jnp.float32)

    loss, quantized, perplexity, encodings = vector_quantizer_ema_forward(
        inputs, embedding_weight, commitment_cost)
    jax.block_until_ready((loss, quantized, perplexity, encodings))

    # Shape / one-hot sanity checks.
    assert quantized.shape == inputs.shape
    assert encodings.shape == (2 * 8, num_embeddings)
    assert bool(jnp.all(jnp.sum(encodings, axis=1) == 1.0))

    # Pure-JAX reference using the same bf16-scored argmin as the kernel.
    flat = inputs.reshape(-1, embedding_dim)
    e_hi = embedding_weight.astype(jnp.bfloat16)
    e_lo = (embedding_weight - e_hi.astype(jnp.float32)).astype(jnp.bfloat16)
    xe_ref = lax.dot_general(
        flat.astype(jnp.bfloat16), e_hi,
        (((1,), (1,)), ((), ())), preferred_element_type=jnp.float32)
    score_ref = xe_ref - 0.5 * jnp.sum(embedding_weight ** 2, axis=1)[None, :]
    idx_ref = jnp.argmax(score_ref, axis=1)
    enc_ref = jax.nn.one_hot(idx_ref, num_embeddings, dtype=jnp.float32)

    # Kernel quantized rows are exactly e_hi + e_lo gathered at the argmin,
    # which matches the true f32 codebook rows to ~2^-16 relative.
    e_split = e_hi.astype(jnp.float32) + e_lo.astype(jnp.float32)
    q_split_ref = e_split[idx_ref].reshape(inputs.shape)
    q_exact_ref = embedding_weight[idx_ref].reshape(inputs.shape)

    loss_ref = commitment_cost * jnp.mean((q_split_ref - inputs) ** 2)
    p_ref = jnp.mean(enc_ref, axis=0)
    ppl_ref = jnp.exp(-jnp.sum(p_ref * jnp.log(p_ref + 1e-10)))

    assert bool(jnp.allclose(quantized, q_split_ref, atol=1e-6))
    assert bool(jnp.allclose(quantized, q_exact_ref, atol=1e-3))
    assert bool(jnp.allclose(encodings, enc_ref))
    assert bool(jnp.allclose(loss, loss_ref, rtol=1e-5, atol=1e-6))
    assert bool(jnp.allclose(perplexity, ppl_ref, rtol=1e-5, atol=1e-5))

    # return_indices path (mirrors the PyTorch flag).
    q2, idx2 = vector_quantizer_ema_forward(
        inputs, embedding_weight, commitment_cost, return_indices=True)
    jax.block_until_ready((q2, idx2))
    assert idx2.shape == (2, 8)
    assert bool(jnp.all(idx2.reshape(-1) == idx_ref))

    print("KERNEL_OK")
</pallas_src>

<mosaic_0001>
module attributes {stable_mosaic.version = 11 : i64} {
  func.func @_vq_kernel(%arg0: i32, %arg1: memref<8x32xf32, #tpu.memory_space<vmem>>, %arg2: memref<128x32xbf16, #tpu.memory_space<vmem>>, %arg3: memref<128x32xbf16, #tpu.memory_space<vmem>>, %arg4: memref<1x128xf32, #tpu.memory_space<vmem>>, %arg5: memref<8x32xf32, #tpu.memory_space<vmem>>, %arg6: memref<1x1x8xi32, #tpu.memory_space<vmem>>, %arg7: memref<1x1x1xf32, #tpu.memory_space<vmem>>, %arg8: memref<1x1x128xf32, #tpu.memory_space<vmem>>) attributes {dimension_semantics = [#tpu.dimension_semantics<parallel>], iteration_bounds = array<i64: 2>, scalar_prefetch = 0 : i64, scratch_operands = 0 : i64, tpu.core_type = #tpu.core_type<tc>, window_params = [{transform_indices = @transform_0, window_bounds = array<i64: 8, 32>}, {pipeline_mode = #tpu.pipeline_mode<synchronous>, transform_indices = @transform_1, window_bounds = array<i64: 128, 32>}, {pipeline_mode = #tpu.pipeline_mode<synchronous>, transform_indices = @transform_2, window_bounds = array<i64: 128, 32>}, {pipeline_mode = #tpu.pipeline_mode<synchronous>, transform_indices = @transform_3, window_bounds = array<i64: 1, 128>}, {transform_indices = @transform_4, window_bounds = array<i64: 8, 32>}, {transform_indices = @transform_5, window_bounds = array<i64: 1, 1, 8>}, {transform_indices = @transform_6, window_bounds = array<i64: 1, 1, 1>}, {transform_indices = @transform_7, window_bounds = array<i64: 1, 1, 128>}]} {
    %c0 = arith.constant 0 : index
    %c0_0 = arith.constant 0 : index
    %0 = vector.load %arg1[%c0, %c0_0] : memref<8x32xf32, #tpu.memory_space<vmem>>, vector<8x32xf32>
    %1 = arith.truncf %0 : vector<8x32xf32> to vector<8x32xbf16>
    %c0_1 = arith.constant 0 : index
    %c0_2 = arith.constant 0 : index
    %2 = vector.load %arg2[%c0_1, %c0_2] : memref<128x32xbf16, #tpu.memory_space<vmem>>, vector<128x32xbf16>
    %cst = arith.constant dense<0.000000e+00> : vector<8x128xf32>
    %3 = tpu.matmul %1, %2, %cst {dimension_numbers = #tpu.dot_dimension_numbers<[1], [1], [0], [0], [0, 0, 1, 0], [], []>} : vector<8x32xbf16>, vector<128x32xbf16>, vector<8x128xf32> -> vector<8x128xf32>
    %c0_3 = arith.constant 0 : index
    %c0_4 = arith.constant 0 : index
    %4 = vector.load %arg4[%c0_3, %c0_4] : memref<1x128xf32, #tpu.memory_space<vmem>>, vector<1x128xf32>
    %5 = vector.broadcast %4 : vector<1x128xf32> to vector<8x128xf32>
    %6 = arith.subf %3, %5 : vector<8x128xf32>
    %7 = tpu.reduce_index %6 {axis = 1 : i32, kind = #tpu.reduction_kind<arg_max>} : vector<8x128xf32> -> vector<8xi32>
    %8 = tpu.iota {dimensions = array<i32: 1>} : vector<8x128xi32>
    %9 = vector.shape_cast %7 : vector<8xi32> to vector<8x1xi32>
    %10 = vector.broadcast %9 : vector<8x1xi32> to vector<8x128xi32>
    %11 = arith.cmpi eq, %8, %10 : vector<8x128xi32>
    %12 = arith.extui %11 : vector<8x128xi1> to vector<8x128xi32>
    %13 = arith.sitofp %12 : vector<8x128xi32> to vector<8x128xf32>
    %14 = arith.truncf %13 : vector<8x128xf32> to vector<8x128xbf16>
    %c0_5 = arith.constant 0 : index
    %c0_6 = arith.constant 0 : index
    %15 = vector.load %arg2[%c0_5, %c0_6] : memref<128x32xbf16, #tpu.memory_space<vmem>>, vector<128x32xbf16>
    %cst_7 = arith.constant dense<0.000000e+00> : vector<8x32xf32>
    %16 = tpu.matmul %14, %15, %cst_7 {dimension_numbers = #tpu.dot_dimension_numbers<[1], [0], [0], [1], [0, 0, 1, 1], [], []>} : vector<8x128xbf16>, vector<128x32xbf16>, vector<8x32xf32> -> vector<8x32xf32>
    %c0_8 = arith.constant 0 : index
    %c0_9 = arith.constant 0 : index
    %17 = vector.load %arg3[%c0_8, %c0_9] : memref<128x32xbf16, #tpu.memory_space<vmem>>, vector<128x32xbf16>
    %cst_10 = arith.constant dense<0.000000e+00> : vector<8x32xf32>
    %18 = tpu.matmul %14, %17, %cst_10 {dimension_numbers = #tpu.dot_dimension_numbers<[1], [0], [0], [1], [0, 0, 1, 1], [], []>} : vector<8x128xbf16>, vector<128x32xbf16>, vector<8x32xf32> -> vector<8x32xf32>
    %19 = arith.addf %16, %18 : vector<8x32xf32>
    %c0_11 = arith.constant 0 : index
    %c0_12 = arith.constant 0 : index
    %20 = vector.load %arg5[%c0_11, %c0_12] : memref<8x32xf32, #tpu.memory_space<vmem>>, vector<8x32xf32>
    tpu.vector_store %arg5[%c0_11, %c0_12], %19 {strides = array<i32>} : memref<8x32xf32, #tpu.memory_space<vmem>>, vector<8x32xf32>,
    %21 = vector.shape_cast %7 : vector<8xi32> to vector<1x1x8xi32>
    %c0_13 = arith.constant 0 : index
    %c0_14 = arith.constant 0 : index
    %c0_15 = arith.constant 0 : index
    %22 = vector.load %arg6[%c0_13, %c0_14, %c0_15] : memref<1x1x8xi32, #tpu.memory_space<vmem>>, vector<1x1x8xi32>
    tpu.vector_store %arg6[%c0_13, %c0_14, %c0_15], %21 {strides = array<i32>} : memref<1x1x8xi32, #tpu.memory_space<vmem>>, vector<1x1x8xi32>,
    %23 = arith.subf %19, %0 : vector<8x32xf32>
    %24 = arith.mulf %23, %23 : vector<8x32xf32>
    %25 = vector.shape_cast %24 : vector<8x32xf32> to vector<1x8x32xf32>
    %cst_16 = arith.constant dense<0.000000e+00> : vector<1xf32>
    %26 = vector.multi_reduction <add>, %25, %cst_16 [1, 2] : vector<1x8x32xf32> to vector<1xf32>
    %27 = vector.shape_cast %26 : vector<1xf32> to vector<1x1x1xf32>
    %28 = vector.extract %27[0, 0, 0] : f32 from vector<1x1x1xf32>
    %29 = vector.broadcast %28 : f32 to vector<1x1x1xf32>
    %c0_17 = arith.constant 0 : index
    %c0_18 = arith.constant 0 : index
    %c0_19 = arith.constant 0 : index
    %30 = vector.load %arg7[%c0_17, %c0_18, %c0_19] : memref<1x1x1xf32, #tpu.memory_space<vmem>>, vector<1x1x1xf32>
    tpu.vector_store %arg7[%c0_17, %c0_18, %c0_19], %29 {strides = array<i32>} : memref<1x1x1xf32, #tpu.memory_space<vmem>>, vector<1x1x1xf32>,
    %cst_20 = arith.constant dense<0.000000e+00> : vector<128xf32>
    %31 = vector.multi_reduction <add>, %13, %cst_20 [0] : vector<8x128xf32> to vector<128xf32>
    %32 = vector.shape_cast %31 : vector<128xf32> to vector<1x1x128xf32>
    %c0_21 = arith.constant 0 : index
    %c0_22 = arith.constant 0 : index
    %c0_23 = arith.constant 0 : index
    %33 = vector.load %arg8[%c0_21, %c0_22, %c0_23] : memref<1x1x128xf32, #tpu.memory_space<vmem>>, vector<1x1x128xf32>
    tpu.vector_store %arg8[%c0_21, %c0_22, %c0_23], %32 {strides = array<i32>} : memref<1x1x128xf32, #tpu.memory_space<vmem>>, vector<1x1x128xf32>,
    return
  }
  func.func @transform_0(%arg0: i32) -> (i32, i32) {
    %c0_i32 = arith.constant 0 : i32
    %c0_i32_0 = arith.constant 0 : i32
    return %arg0, %c0_i32 : i32, i32
  }
  func.func @transform_1(%arg0: i32) -> (i32, i32) {
    %c0_i32 = arith.constant 0 : i32
    %c0_i32_0 = arith.constant 0 : i32
    %c0_i32_1 = arith.constant 0 : i32
    return %c0_i32, %c0_i32_0 : i32, i32
  }
  func.func @transform_2(%arg0: i32) -> (i32, i32) {
    %c0_i32 = arith.constant 0 : i32
    %c0_i32_0 = arith.constant 0 : i32
    %c0_i32_1 = arith.constant 0 : i32
    return %c0_i32, %c0_i32_0 : i32, i32
  }
  func.func @transform_3(%arg0: i32) -> (i32, i32) {
    %c0_i32 = arith.constant 0 : i32
    %c0_i32_0 = arith.constant 0 : i32
    %c0_i32_1 = arith.constant 0 : i32
    return %c0_i32, %c0_i32_0 : i32, i32
  }
  func.func @transform_4(%arg0: i32) -> (i32, i32) {
    %c0_i32 = arith.constant 0 : i32
    %c0_i32_0 = arith.constant 0 : i32
    return %arg0, %c0_i32 : i32, i32
  }
  func.func @transform_5(%arg0: i32) -> (i32, i32, i32) {
    %c0_i32 = arith.constant 0 : i32
    %c0_i32_0 = arith.constant 0 : i32
    %c0_i32_1 = arith.constant 0 : i32
    return %arg0, %c0_i32, %c0_i32_0 : i32, i32, i32
  }
  func.func @transform_6(%arg0: i32) -> (i32, i32, i32) {
    %c0_i32 = arith.constant 0 : i32
    %c0_i32_0 = arith.constant 0 : i32
    %c0_i32_1 = arith.constant 0 : i32
    return %arg0, %c0_i32, %c0_i32_0 : i32, i32, i32
  }
  func.func @transform_7(%arg0: i32) -> (i32, i32, i32) {
    %c0_i32 = arith.constant 0 : i32
    %c0_i32_0 = arith.constant 0 : i32
    %c0_i32_1 = arith.constant 0 : i32
    return %arg0, %c0_i32, %c0_i32_0 : i32, i32, i32
  }
}

</mosaic_0001>

<llo_original>
// kernel: tpu_custom_call.1
$region0: #{tpu_custom_call.1}
  #allocation0 [shape = 'u32[]', space=smem, size = 0x4, offset = 0x4, fixed_abs, tag = 'smem constant byte address 0x4 - core index']
  #allocation1 [shape = 'u32[72,128]{1,0:T(1,128)}', space=vmem, size = 0x9000, scoped, tag = 'internal scratch']
  %s0 = inlined_call_operand.vmem [shape: f32[16,32], index: 0, kind: input, shape index: {}]
  %s1 = inlined_call_operand.vmem [shape: bf16[128,32], index: 1, kind: input, shape index: {}]
  %s2 = inlined_call_operand.vmem [shape: bf16[128,32], index: 2, kind: input, shape index: {}]
  %s3 = inlined_call_operand.vmem [shape: f32[1,128], index: 3, kind: input, shape index: {}]
  %s4 = inlined_call_operand.hbm [shape: f32[16,32], index: 4, kind: output, shape index: {0}]
  %s5 = inlined_call_operand.hbm [shape: s32[2,1,8], index: 5, kind: output, shape index: {1}]
  %s6 = inlined_call_operand.vmem [shape: f32[2,1,1], index: 6, kind: output, shape index: {2}]
  %s7 = inlined_call_operand.hbm [shape: f32[2,1,128], index: 7, kind: output, shape index: {3}]
  %8 = xla_tuple %s4, %s5, %s6, %s7
  %s9 = sld [smem:[#allocation0]]
  $region73: #{tpu_custom_call.1} parent=0
    _
  %s11 = ssub.s32 1, %s9
  %s12 = scalar_select 0, %s11, %s9
  $region1: #{tpu_custom_call.1} parent=0
    #allocation2 [shape = 'u8[8192]{0}', space=vmem, size = 0x2000, scoped, tag = 'output window, operand 0']
    #allocation3 [shape = 's32[2]{0}', space=sflag, size = 0x8, scoped, tag = 'scoped memory for tpu_custom_call.1']
    #allocation4 [shape = 'u8[1024]{0}', space=vmem, size = 0x400, scoped, tag = 'output window, operand 1']
    #allocation5 [shape = 's32[2]{0}', space=sflag, size = 0x8, scoped, tag = 'scoped memory for tpu_custom_call.1']
    #allocation6 [shape = 'u8[1024]{0}', space=vmem, size = 0x400, scoped, tag = 'output window, operand 3']
    %13 = vsyncpa [#allocation3], 0
    %s14 = scalar_lea.sflag [#allocation3], 1
    %15 = vsyncpa %s14, 0
    %16 = vsyncpa [#allocation5], 0
    %s17 = scalar_lea.sflag [#allocation5], 1
    %18 = vsyncpa %s17, 0
    loop: start=0, step=1, limit=4
    $region2: #{tpu_custom_call.1} parent=1 // loop_pre_header
      _
    $region3: #{tpu_custom_call.1} parent=1 // loop_header
      %s20 = sphi 0, %s24
      %p21 = scmp.ge.s32.totalorder %s20, 4
      %s30 = sphi 0, %s32
      %s33 = sphi 0, %s30
      %s34 = sphi 0, %s33
      %s50 = sphi 0, %s34
      %s54 = sphi 0, %s54
      %s56 = sphi 0, %s54
      %s57 = sphi 0, %s56
      %s71 = sphi 0, %s57
      %s75 = sphi 0, %s75
      %s77 = sphi 0, %s75
      %s78 = sphi 0, %s77
      %s92 = sphi 0, %s78
      %s96 = sphi 0, %s96
      %s98 = sphi 0, %s96
      %s99 = sphi 0, %s98
      %s113 = sphi 0, %s99
      %s119 = sphi 0, %s121
      %s122 = sphi 0, %s119
      %s123 = sphi 0, %s122
      %s139 = sphi 0, %s123
      %s145 = sphi 0, %s147
      %s148 = sphi 0, %s145
      %s149 = sphi 0, %s148
      %s165 = sphi 0, %s149
      %s171 = sphi 0, %s173
      %s174 = sphi 0, %s171
      %s175 = sphi 0, %s174
      %s191 = sphi 0, %s175
      %s197 = sphi 0, %s199
      %s200 = sphi 0, %s197
      %s201 = sphi 0, %s200
      %s217 = sphi 0, %s201
    $region4: #{tpu_custom_call.1} parent=1 // loop_header_branch
      %23 = sbr.rel (%p21) target = $region8
    $region5: #{tpu_custom_call.1} parent=1 // loop_body
      %s25 = ssub.s32 %s20, 1
      %s26 = ssub.s32 %s20, 2
      %s27 = sadd.s32 %s20, 1
      %s28 = ssub.s32 %s20, %s27
      %p29 = scmp.eq.s32.totalorder %s28, 0
      %s31 = sadd.s32 %s30, 1
      %s32 = scalar_select %p29, %s30, %s31
      %p35 = pneg %p29
      %p36 = scmp.eq.s32.totalorder %s20, 1
      %p37 = por %p35, %p36
      %p38 = scmp.ne.s32.totalorder %s30, %s33
      %p39 = scmp.eq.s32.totalorder %s20, 0
      %p40 = por %p38, %p39
      %p41 = scmp.ne.s32.totalorder %s30, %s33
      %p42 = scmp.eq.s32.totalorder %s25, 1
      %p43 = por %p41, %p42
      %p44 = scmp.ne.s32.totalorder %s33, %s34
      %p45 = scmp.eq.s32.totalorder %s25, 0
      %p46 = por %p44, %p45
      %p47 = scmp.ne.s32.totalorder %s33, %s34
      %p48 = scmp.eq.s32.totalorder %s26, 1
      %p49 = por %p47, %p48
      %p51 = scmp.ne.s32.totalorder %s34, %s50
      %p52 = scmp.eq.s32.totalorder %s26, 0
      %p53 = por %p51, %p52
      %s55 = sadd.s32 %s54, 1
      %p58 = scmp.eq.s32.totalorder %s20, 1
      %p59 = scmp.ne.s32.totalorder %s54, %s56
      %p60 = scmp.eq.s32.totalorder %s20, 0
      %p61 = por %p59, %p60
      %p62 = scmp.ne.s32.totalorder %s54, %s56
      %p63 = scmp.eq.s32.totalorder %s25, 1
      %p64 = por %p62, %p63
      %p65 = scmp.ne.s32.totalorder %s56, %s57
      %p66 = scmp.eq.s32.totalorder %s25, 0
      %p67 = por %p65, %p66
      %p68 = scmp.ne.s32.totalorder %s56, %s57
      %p69 = scmp.eq.s32.totalorder %s26, 1
      %p70 = por %p68, %p69
      %p72 = scmp.ne.s32.totalorder %s57, %s71
      %p73 = scmp.eq.s32.totalorder %s26, 0
      %p74 = por %p72, %p73
      %s76 = sadd.s32 %s75, 1
      %p79 = scmp.eq.s32.totalorder %s20, 1
      %p80 = scmp.ne.s32.totalorder %s75, %s77
      %p81 = scmp.eq.s32.totalorder %s20, 0
      %p82 = por %p80, %p81
      %p83 = scmp.ne.s32.totalorder %s75, %s77
      %p84 = scmp.eq.s32.totalorder %s25, 1
      %p85 = por %p83, %p84
      %p86 = scmp.ne.s32.totalorder %s77, %s78
      %p87 = scmp.eq.s32.totalorder %s25, 0
      %p88 = por %p86, %p87
      %p89 = scmp.ne.s32.totalorder %s77, %s78
      %p90 = scmp.eq.s32.totalorder %s26, 1
      %p91 = por %p89, %p90
      %p93 = scmp.ne.s32.totalorder %s78, %s92
      %p94 = scmp.eq.s32.totalorder %s26, 0
      %p95 = por %p93, %p94
      %s97 = sadd.s32 %s96, 1
      %p100 = scmp.eq.s32.totalorder %s20, 1
      %p101 = scmp.ne.s32.totalorder %s96, %s98
      %p102 = scmp.eq.s32.totalorder %s20, 0
      %p103 = por %p101, %p102
      %p104 = scmp.ne.s32.totalorder %s96, %s98
      %p105 = scmp.eq.s32.totalorder %s25, 1
      %p106 = por %p104, %p105
      %p107 = scmp.ne.s32.totalorder %s98, %s99
      %p108 = scmp.eq.s32.totalorder %s25, 0
      %p109 = por %p107, %p108
      %p110 = scmp.ne.s32.totalorder %s98, %s99
      %p111 = scmp.eq.s32.totalorder %s26, 1
      %p112 = por %p110, %p111
      %p114 = scmp.ne.s32.totalorder %s99, %s113
      %p115 = scmp.eq.s32.totalorder %s26, 0
      %p116 = por %p114, %p115
      %s117 = ssub.s32 %s20, %s27
      %p118 = scmp.eq.s32.totalorder %s117, 0
      %s120 = sadd.s32 %s119, 1
      %s121 = scalar_select %p118, %s119, %s120
      %p124 = pneg %p118
      %p125 = scmp.eq.s32.totalorder %s20, 1
      %p126 = por %p124, %p125
      %p127 = scmp.ne.s32.totalorder %s119, %s122
      %p128 = scmp.eq.s32.totalorder %s20, 0
      %p129 = por %p127, %p128
      %p130 = scmp.ne.s32.totalorder %s119, %s122
      %p131 = scmp.eq.s32.totalorder %s25, 1
      %p132 = por %p130, %p131
      %p133 = scmp.ne.s32.totalorder %s122, %s123
      %p134 = scmp.eq.s32.totalorder %s25, 0
      %p135 = por %p133, %p134
      %p136 = scmp.ne.s32.totalorder %s122, %s123
      %p137 = scmp.eq.s32.totalorder %s26, 1
      %p138 = por %p136, %p137
      %p140 = scmp.ne.s32.totalorder %s123, %s139
      %p141 = scmp.eq.s32.totalorder %s26, 0
      %p142 = por %p140, %p141
      %s143 = ssub.s32 %s20, %s27
      %p144 = scmp.eq.s32.totalorder %s143, 0
      %s146 = sadd.s32 %s145, 1
      %s147 = scalar_select %p144, %s145, %s146
      %p150 = pneg %p144
      %p151 = scmp.eq.s32.totalorder %s20, 1
      %p152 = por %p150, %p151
      %p153 = scmp.ne.s32.totalorder %s145, %s148
      %p154 = scmp.eq.s32.totalorder %s20, 0
      %p155 = por %p153, %p154
      %p156 = scmp.ne.s32.totalorder %s145, %s148
      %p157 = scmp.eq.s32.totalorder %s25, 1
      %p158 = por %p156, %p157
      %p159 = scmp.ne.s32.totalorder %s148, %s149
      %p160 = scmp.eq.s32.totalorder %s25, 0
      %p161 = por %p159, %p160
      %p162 = scmp.ne.s32.totalorder %s148, %s149
      %p163 = scmp.eq.s32.totalorder %s26, 1
      %p164 = por %p162, %p163
      %p166 = scmp.ne.s32.totalorder %s149, %s165
      %p167 = scmp.eq.s32.totalorder %s26, 0
      %p168 = por %p166, %p167
      %s169 = ssub.s32 %s20, %s27
      %p170 = scmp.eq.s32.totalorder %s169, 0
      %s172 = sadd.s32 %s171, 1
      %s173 = scalar_select %p170, %s171, %s172
      %p176 = pneg %p170
      %p177 = scmp.eq.s32.totalorder %s20, 1
      %p178 = por %p176, %p177
      %p179 = scmp.ne.s32.totalorder %s171, %s174
      %p180 = scmp.eq.s32.totalorder %s20, 0
      %p181 = por %p179, %p180
      %p182 = scmp.ne.s32.totalorder %s171, %s174
      %p183 = scmp.eq.s32.totalorder %s25, 1
      %p184 = por %p182, %p183
      %p185 = scmp.ne.s32.totalorder %s174, %s175
      %p186 = scmp.eq.s32.totalorder %s25, 0
      %p187 = por %p185, %p186
      %p188 = scmp.ne.s32.totalorder %s174, %s175
      %p189 = scmp.eq.s32.totalorder %s26, 1
      %p190 = por %p188, %p189
      %p192 = scmp.ne.s32.totalorder %s175, %s191
      %p193 = scmp.eq.s32.totalorder %s26, 0
      %p194 = por %p192, %p193
      %s195 = ssub.s32 %s20, %s27
      %p196 = scmp.eq.s32.totalorder %s195, 0
      %s198 = sadd.s32 %s197, 1
      %s199 = scalar_select %p196, %s197, %s198
      %p202 = pneg %p196
      %p203 = scmp.eq.s32.totalorder %s20, 1
      %p204 = por %p202, %p203
      %p205 = scmp.ne.s32.totalorder %s197, %s200
      %p206 = scmp.eq.s32.totalorder %s20, 0
      %p207 = por %p205, %p206
      %p208 = scmp.ne.s32.totalorder %s197, %s200
      %p209 = scmp.eq.s32.totalorder %s25, 1
      %p210 = por %p208, %p209
      %p211 = scmp.ne.s32.totalorder %s200, %s201
      %p212 = scmp.eq.s32.totalorder %s25, 0
      %p213 = por %p211, %p212
      %p214 = scmp.ne.s32.totalorder %s200, %s201
      %p215 = scmp.eq.s32.totalorder %s26, 1
      %p216 = por %p214, %p215
      %p218 = scmp.ne.s32.totalorder %s201, %s217
      %p219 = scmp.eq.s32.totalorder %s26, 0
      %p220 = por %p218, %p219
      %p221 = scmp.le.s32.totalorder 1, %s20
      %p222 = scmp.lt.s32.totalorder %s20, 3
      %p223 = pnand %p221, %p222
      %p224 = pneg %p223
      // Predicated region
      $region9: #{tpu_custom_call.1} parent=5 // pred_check
        _
      $region10: #{tpu_custom_call.1} parent=5 // pred_check_branch
        %226 = sbr.rel (%p223) target = $region12
      $region11: #{tpu_custom_call.1} parent=5 // pred_region
        %s227 = ssub.s32 %s20, 1
        // Predicated region
        $region13: #{tpu_custom_call.1} parent=11 // pred_check
          %p228 = pneg %p67
        $region14: #{tpu_custom_call.1} parent=11 // pred_check_branch
          %230 = sbr.rel (%p228) target = $region16
        $region15: #{tpu_custom_call.1} parent=11 // pred_region
          _
        $region16: #{tpu_custom_call.1} parent=11 // pred_fallthru
          _
        // Predicated region
        $region17: #{tpu_custom_call.1} parent=11 // pred_check
          %p231 = pneg %p88
        $region18: #{tpu_custom_call.1} parent=11 // pred_check_branch
          %233 = sbr.rel (%p231) target = $region20
        $region19: #{tpu_custom_call.1} parent=11 // pred_region
          _
        $region20: #{tpu_custom_call.1} parent=11 // pred_fallthru
          _
        // Predicated region
        $region21: #{tpu_custom_call.1} parent=11 // pred_check
          %p234 = pneg %p109
        $region22: #{tpu_custom_call.1} parent=11 // pred_check_branch
          %236 = sbr.rel (%p234) target = $region24
        $region23: #{tpu_custom_call.1} parent=11 // pred_region
          _
        $region24: #{tpu_custom_call.1} parent=11 // pred_fallthru
          _
      $region12: #{tpu_custom_call.1} parent=5 // pred_fallthru
        _
      %p237 = scmp.lt.s32.totalorder %s20, 2
      // Predicated region
      $region25: #{tpu_custom_call.1} parent=5 // pred_check
        %p238 = pneg %p237
      $region26: #{tpu_custom_call.1} parent=5 // pred_check_branch
        %240 = sbr.rel (%p238) target = $region28
      $region27: #{tpu_custom_call.1} parent=5 // pred_region
        // Predicated region
        $region29: #{tpu_custom_call.1} parent=27 // pred_check
          %p241 = pneg %p40
        $region30: #{tpu_custom_call.1} parent=27 // pred_check_branch
          %243 = sbr.rel (%p241) target = $region32
        $region31: #{tpu_custom_call.1} parent=27 // pred_region
          %p244 = scmp.lt.s32.totalorder %s20, 1
          %s245 = scalar_select %p244, %s20, 1
          %s246 = smul.addr %s245, 8
          %s247 = scalar_lea.vmem %s0, %s246
        $region32: #{tpu_custom_call.1} parent=27 // pred_fallthru
          _
      $region28: #{tpu_custom_call.1} parent=5 // pred_fallthru
        _
      %p248 = scmp.le.s32.totalorder 1, %s20
      %p249 = scmp.lt.s32.totalorder %s20, 3
      %p250 = pnand %p248, %p249
      %p251 = pneg %p250
      // Predicated region
      $region33: #{tpu_custom_call.1} parent=5 // pred_check
        _
      $region34: #{tpu_custom_call.1} parent=5 // pred_check_branch
        %253 = sbr.rel (%p250) target = $region36
      $region35: #{tpu_custom_call.1} parent=5 // pred_region
        %s254 = ssub.s32 %s20, 1
        %p255 = scmp.lt.s32.totalorder %s25, 1
        %s256 = scalar_select %p255, %s25, 1
        %s257 = smul.addr %s256, 8
        %s258 = scalar_lea.vmem %s0, %s257
        %p259 = pneg %p46
        %p260 = pneg %p43
        %p261 = pneg %p67
        %p262 = pneg %p64
        %p263 = pneg %p88
        %p264 = pneg %p85
        %p265 = pneg %p109
        %p266 = pneg %p106
        %p267 = pneg %p135
        %p268 = pneg %p132
        %s269 = sand.u32 %s122, 1
        %s270 = scalar_lea.sflag [#allocation3], %s269
        %s271 = sand.u32 %s122, 1
        %s272 = smul.addr %s271, 8
        %s273 = scalar_lea.vmem [#allocation2], %s272
        %p274 = pneg %p161
        %p275 = pneg %p158
        %s276 = sand.u32 %s25, 1
        %s277 = scalar_lea.sflag [#allocation5], %s276
        %s278 = sand.u32 %s148, 1
        %s279 = scalar_lea.vmem [#allocation4], %s278
        %p280 = pneg %p187
        %p281 = pneg %p184
        %p282 = scmp.lt.s32.totalorder %s25, 1
        %s283 = scalar_select %p282, %s25, 1
        %s284 = scalar_lea.vmem %s6, %s283
        %p285 = pneg %p213
        %p286 = pneg %p210
        %s287 = sand.u32 %s25, 1
        %s288 = scalar_lea.sflag [#allocation5], %s287
        %s289 = sand.u32 %s200, 1
        %s290 = scalar_lea.vmem [#allocation6], %s289
        %p291 = scmp.lt.s32.totalorder %s25, 1
        %s292 = scalar_select %p291, %s25, 1
        %s293 = smul.addr %s292, 8
        %s294 = scalar_lea.vmem %s0, %s293
        %p295 = scmp.lt.s32.totalorder %s25, 1
        %s296 = scalar_select %p295, %s25, 1
        %s297 = scalar_lea.vmem %s6, %s296
        %v298 = vld [vmem:[%s294] sm:$0xff]
        %v299 = vpack.c.bf16 %v298, %v298
        %v300 = vld [vmem:[%s1] sm:$0xf]
        %v301 = vld [vmem:[%s1 + $0x4] sm:$0xf]
        %v302 = vld [vmem:[%s1 + $0x8] sm:$0xf]
        %v303 = vld [vmem:[%s1 + $0xc] sm:$0xf]
        %v304 = vld [vmem:[%s1 + $0x10] sm:$0xf]
        %v305 = vld [vmem:[%s1 + $0x14] sm:$0xf]
        %v306 = vld [vmem:[%s1 + $0x18] sm:$0xf]
        %v307 = vld [vmem:[%s1 + $0x1c] sm:$0xf]
        %v308 = vld [vmem:[%s1 + $0x20] sm:$0xf]
        %v309 = vld [vmem:[%s1 + $0x24] sm:$0xf]
        %v310 = vld [vmem:[%s1 + $0x28] sm:$0xf]
        %v311 = vld [vmem:[%s1 + $0x2c] sm:$0xf]
        %v312 = vld [vmem:[%s1 + $0x30] sm:$0xf]
        %v313 = vld [vmem:[%s1 + $0x34] sm:$0xf]
        %v314 = vld [vmem:[%s1 + $0x38] sm:$0xf]
        %v315 = vld [vmem:[%s1 + $0x3c] sm:$0xf]
        %v332 = vunpack.c.l.b16 %v300
        %v333 = vunpack.c.l.b16 %v301
        %v334 = vunpack.c.l.b16 %v302
        %v335 = vunpack.c.l.b16 %v303
        %v336 = vunpack.c.l.b16 %v304
        %v337 = vunpack.c.l.b16 %v305
        %v338 = vunpack.c.l.b16 %v306
        %v339 = vunpack.c.l.b16 %v307
        %v340 = vunpack.c.l.b16 %v308
        %v341 = vunpack.c.l.b16 %v309
        %v342 = vunpack.c.l.b16 %v310
        %v343 = vunpack.c.l.b16 %v311
        %v344 = vunpack.c.l.b16 %v312
        %v345 = vunpack.c.l.b16 %v313
        %v346 = vunpack.c.l.b16 %v314
        %v347 = vunpack.c.l.b16 %v315
        %v348 = vpack.c.b16 %v333, %v332
        %v349 = vpack.c.b16 %v335, %v334
        %v350 = vpack.c.b16 %v337, %v336
        %v351 = vpack.c.b16 %v339, %v338
        %v352 = vpack.c.b16 %v341, %v340
        %v353 = vpack.c.b16 %v343, %v342
        %v354 = vpack.c.b16 %v345, %v344
        %v355 = vpack.c.b16 %v347, %v346
        %vm356 = vcmask 261120
        %v358 = vsel %vm356, %v299, 0
        %v361 = vsel %vm356, %v348, 0
        %v364 = vsel %vm356, %v349, 0
        %v367 = vsel %vm356, %v350, 0
        %v370 = vsel %vm356, %v351, 0
        %v373 = vsel %vm356, %v352, 0
        %v376 = vsel %vm356, %v353, 0
        %v379 = vsel %vm356, %v354, 0
        %v382 = vsel %vm356, %v355, 0
        %384 = vmatpush.bf16.xpose.msra.mxu0 %v382
        %385 = vmatpush.bf16.xpose.msra.mxu0 %v379
        %386 = vmatpush.bf16.xpose.msra.mxu0 %v376
        %387 = vmatpush.bf16.xpose.msra.mxu0 %v373
        %388 = vmatpush.bf16.xpose.msra.mxu0 %v370
        %389 = vmatpush.bf16.xpose.msra.mxu0 %v367
        %390 = vmatpush.bf16.xpose.msra.mxu0 %v364
        %391 = vmatpush.bf16.xpose.msra.mxu0 %v361
        %392 = vmatmul.bf16.gmra.mxu0 %v358
        %v393 = vpop.f32.mrf.mxu0
        %v394 = vadd.f32 0.0, %v393
        %v395 = vpop.f32.mrf.mxu0
        %396 = vdwg.mxu0
        %v397 = vld [vmem:[%s3] sm:$0x1]
        %v399 = vperm.slane %v397, 0
        %v401 = vsub.f32 %v394, %v399
        %402 = vmax.index.xlane.f32.xlu0 %v401
        %v403 = vpop.xlane.xlu0 %402
        %v404 = vlaneseq
        %v405 = vand.u32 %v404, 127
        %vm406 = vcmp.eq.s32.totalorder %v405, %v403
        %v407 = vsel %vm406, 1, 0
        %v408 = vcvt.s32.f32 %v407
        %v409 = vpack.c.bf16 %v408, %v408
        %v410 = vld [vmem:[%s2] sm:$0xf]
        %v411 = vld [vmem:[%s2 + $0x4] sm:$0xf]
        %v412 = vld [vmem:[%s2 + $0x8] sm:$0xf]
        %v413 = vld [vmem:[%s2 + $0xc] sm:$0xf]
        %v414 = vld [vmem:[%s2 + $0x10] sm:$0xf]
        %v415 = vld [vmem:[%s2 + $0x14] sm:$0xf]
        %v416 = vld [vmem:[%s2 + $0x18] sm:$0xf]
        %v417 = vld [vmem:[%s2 + $0x1c] sm:$0xf]
        %v418 = vld [vmem:[%s2 + $0x20] sm:$0xf]
        %v419 = vld [vmem:[%s2 + $0x24] sm:$0xf]
        %v420 = vld [vmem:[%s2 + $0x28] sm:$0xf]
        %v421 = vld [vmem:[%s2 + $0x2c] sm:$0xf]
        %v422 = vld [vmem:[%s2 + $0x30] sm:$0xf]
        %v423 = vld [vmem:[%s2 + $0x34] sm:$0xf]
        %v424 = vld [vmem:[%s2 + $0x38] sm:$0xf]
        %v425 = vld [vmem:[%s2 + $0x3c] sm:$0xf]
        %v442 = vunpack.c.l.b16 %v410
        %v443 = vunpack.c.l.b16 %v411
        %v444 = vunpack.c.l.b16 %v412
        %v445 = vunpack.c.l.b16 %v413
        %v446 = vunpack.c.l.b16 %v414
        %v447 = vunpack.c.l.b16 %v415
        %v448 = vunpack.c.l.b16 %v416
        %v449 = vunpack.c.l.b16 %v417
        %v450 = vunpack.c.l.b16 %v418
        %v451 = vunpack.c.l.b16 %v419
        %v452 = vunpack.c.l.b16 %v420
        %v453 = vunpack.c.l.b16 %v421
        %v454 = vunpack.c.l.b16 %v422
        %v455 = vunpack.c.l.b16 %v423
        %v456 = vunpack.c.l.b16 %v424
        %v457 = vunpack.c.l.b16 %v425
        %v458 = vpack.c.b16 %v443, %v442
        %v459 = vpack.c.b16 %v445, %v444
        %v460 = vpack.c.b16 %v447, %v446
        %v461 = vpack.c.b16 %v449, %v448
        %v462 = vpack.c.b16 %v451, %v450
        %v463 = vpack.c.b16 %v453, %v452
        %v464 = vpack.c.b16 %v455, %v454
        %v465 = vpack.c.b16 %v457, %v456
        %474 = vmatpush.bf16.msra.mxu0 %v465
        %475 = vmatpush.bf16.msra.mxu0 %v464
        %476 = vmatpush.bf16.msra.mxu0 %v463
        %477 = vmatpush.bf16.msra.mxu0 %v462
        %478 = vmatpush.bf16.msra.mxu0 %v461
        %479 = vmatpush.bf16.msra.mxu0 %v460
        %480 = vmatpush.bf16.msra.mxu0 %v459
        %481 = vmatpush.bf16.msra.mxu0 %v458
        %482 = vmatmul.bf16.gmra.mxu0 %v409
        %v483 = vpop.f32.mrf.mxu0
        %v484 = vadd.f32 0.0, %v483
        %v485 = vpop.f32.mrf.mxu0
        %486 = vdwg.mxu0
        %495 = vmatpush.bf16.msra.mxu0 %v355
        %496 = vmatpush.bf16.msra.mxu0 %v354
        %497 = vmatpush.bf16.msra.mxu0 %v353
        %498 = vmatpush.bf16.msra.mxu0 %v352
        %499 = vmatpush.bf16.msra.mxu0 %v351
        %500 = vmatpush.bf16.msra.mxu0 %v350
        %501 = vmatpush.bf16.msra.mxu0 %v349
        %502 = vmatpush.bf16.msra.mxu0 %v348
        %503 = vmatmul.bf16.gmra.mxu0 %v409
        %v504 = vpop.f32.mrf.mxu0
        %v505 = vadd.f32 %v484, %v504
        %v506 = vpop.f32.mrf.mxu0
        %507 = vdwg.mxu0
        %508 = vst.msk [vmem:[%s273] sm:$0xff] %vm356, %v505
        %v509 = vperm.slane %v403, %v405
        %vm510 = vcmask 57344
        %511 = vst.msk [vmem:[%s279] sm:$0x1] %vm510, %v509
        %v512 = vsub.f32 %v505, %v298
        %v513 = vmul.f32 %v512, %v512
        %v514 = vsel %vm356, %v513, 0.0
        %515 = vadd.xlane.f32.xlu0 %v514
        %v516 = vpop.xlane.xlu0 %515
        %v517 = vrot.slane %v516, 4
        %v518 = vadd.f32 %v516, %v517
        %v519 = vrot.slane %v518, 2
        %v520 = vadd.f32 %v518, %v519
        %v521 = vrot.slane %v520, 1
        %v522 = vadd.f32 %v520, %v521
        %s523 = vtos %v522
        %v524 = vstv %s523
        %vm525 = vcmask 0
        %526 = vst.msk [vmem:[%s297] sm:$0x1] %vm525, %v524
        %v527 = vrot.slane %v408, 4
        %v528 = vadd.f32 %v408, %v527
        %v529 = vrot.slane %v528, 2
        %v530 = vadd.f32 %v528, %v529
        %v531 = vrot.slane %v530, 1
        %v532 = vadd.f32 %v530, %v531
        %533 = vst [vmem:[%s290] sm:$0x1] %v532
        %s534 = sand.u32 %s122, 1
        %s535 = scalar_lea.sflag [#allocation3], %s534
        %s536 = sand.u32 %s122, 1
        %s537 = smul.addr %s536, 8
        %s538 = scalar_lea.vmem [#allocation2], %s537
        %s539 = sand.u32 %s25, 1
        %s540 = scalar_lea.sflag [#allocation5], %s539
        %s541 = sand.u32 %s148, 1
        %s542 = scalar_lea.vmem [#allocation4], %s541
        %p543 = scmp.lt.s32.totalorder %s25, 1
        %s544 = scalar_select %p543, %s25, 1
        %s545 = scalar_lea.vmem %s6, %s544
        %s546 = sand.u32 %s25, 1
        %s547 = scalar_lea.sflag [#allocation5], %s546
        %s548 = sand.u32 %s200, 1
        %s549 = scalar_lea.vmem [#allocation6], %s548
        // Predicated region
        $region37: #{tpu_custom_call.1} parent=35 // pred_check
          %p550 = pneg %p132
        $region38: #{tpu_custom_call.1} parent=35 // pred_check_branch
          %552 = sbr.rel (%p550) target = $region40
        $region39: #{tpu_custom_call.1} parent=35 // pred_region
          %554 = vsyncadd %s535, 0
          %s555 = smul.addr %s25, 8
          %s556 = scalar_lea.hbm %s4, %s555
          %s558 = sshll.u32 %s538, 4
          %s559 = int_to_ptr.vmem [resolvable:$true] %s558
          %s560 = sshll.u32 %s556, 4
          %s561 = int_to_ptr.hbm [resolvable:$true] %s560
          %563 = dma.vmem_to_hbm [thread:$0]  %s559, 128, %s561, %s535
        $region40: #{tpu_custom_call.1} parent=35 // pred_fallthru
          _
        // Predicated region
        $region41: #{tpu_custom_call.1} parent=35 // pred_check
          %p564 = pneg %p158
        $region42: #{tpu_custom_call.1} parent=35 // pred_check_branch
          %566 = sbr.rel (%p564) target = $region44
        $region43: #{tpu_custom_call.1} parent=35 // pred_region
          %568 = vsyncadd %s540, 0
          %s569 = scalar_lea.hbm %s5, %s25
          %s571 = sshll.u32 %s542, 4
          %s572 = int_to_ptr.vmem [resolvable:$true] %s571
          %s573 = sshll.u32 %s569, 4
          %s574 = int_to_ptr.hbm [resolvable:$true] %s573
          %576 = dma.vmem_to_hbm [thread:$0]  %s572, 16, %s574, %s540
        $region44: #{tpu_custom_call.1} parent=35 // pred_fallthru
          _
        // Predicated region
        $region45: #{tpu_custom_call.1} parent=35 // pred_check
          %p577 = pneg %p184
        $region46: #{tpu_custom_call.1} parent=35 // pred_check_branch
          %579 = sbr.rel (%p577) target = $region48
        $region47: #{tpu_custom_call.1} parent=35 // pred_region
          _
        $region48: #{tpu_custom_call.1} parent=35 // pred_fallthru
          _
        // Predicated region
        $region49: #{tpu_custom_call.1} parent=35 // pred_check
          %p580 = pneg %p210
        $region50: #{tpu_custom_call.1} parent=35 // pred_check_branch
          %582 = sbr.rel (%p580) target = $region52
        $region51: #{tpu_custom_call.1} parent=35 // pred_region
          %584 = vsyncadd %s547, 0
          %s585 = scalar_lea.hbm %s7, %s25
          %s587 = sshll.u32 %s549, 4
          %s588 = int_to_ptr.vmem [resolvable:$true] %s587
          %s589 = sshll.u32 %s585, 4
          %s590 = int_to_ptr.hbm [resolvable:$true] %s589
          %592 = dma.vmem_to_hbm [thread:$0]  %s588, 16, %s590, %s547
        $region52: #{tpu_custom_call.1} parent=35 // pred_fallthru
          _
      $region36: #{tpu_custom_call.1} parent=5 // pred_fallthru
        _
      %p593 = scmp.le.s32.totalorder 2, %s20
      // Predicated region
      $region53: #{tpu_custom_call.1} parent=5 // pred_check
        %p594 = pneg %p593
      $region54: #{tpu_custom_call.1} parent=5 // pred_check_branch
        %596 = sbr.rel (%p594) target = $region56
      $region55: #{tpu_custom_call.1} parent=5 // pred_region
        %s597 = ssub.s32 %s20, 2
        // Predicated region
        $region57: #{tpu_custom_call.1} parent=55 // pred_check
          %p598 = pneg %p138
        $region58: #{tpu_custom_call.1} parent=55 // pred_check_branch
          %600 = sbr.rel (%p598) target = $region60
        $region59: #{tpu_custom_call.1} parent=55 // pred_region
          %s601 = sand.u32 %s123, 1
          %s602 = scalar_lea.sflag [#allocation3], %s601
          %s603 = sand.u32 %s123, 1
          %s604 = smul.addr %s603, 8
          %s605 = scalar_lea.vmem [#allocation2], %s604
          %607 = dma.done %s602, 128
        $region60: #{tpu_custom_call.1} parent=55 // pred_fallthru
          _
        // Predicated region
        $region61: #{tpu_custom_call.1} parent=55 // pred_check
          %p608 = pneg %p164
        $region62: #{tpu_custom_call.1} parent=55 // pred_check_branch
          %610 = sbr.rel (%p608) target = $region64
        $region63: #{tpu_custom_call.1} parent=55 // pred_region
          %s611 = sand.u32 %s26, 1
          %s612 = scalar_lea.sflag [#allocation5], %s611
          %s613 = sand.u32 %s149, 1
          %s614 = scalar_lea.vmem [#allocation4], %s613
          %616 = dma.done %s612, 16
        $region64: #{tpu_custom_call.1} parent=55 // pred_fallthru
          _
        // Predicated region
        $region65: #{tpu_custom_call.1} parent=55 // pred_check
          %p617 = pneg %p190
        $region66: #{tpu_custom_call.1} parent=55 // pred_check_branch
          %619 = sbr.rel (%p617) target = $region68
        $region67: #{tpu_custom_call.1} parent=55 // pred_region
          %p620 = scmp.lt.s32.totalorder %s26, 1
          %s621 = scalar_select %p620, %s26, 1
          %s622 = scalar_lea.vmem %s6, %s621
        $region68: #{tpu_custom_call.1} parent=55 // pred_fallthru
          _
        // Predicated region
        $region69: #{tpu_custom_call.1} parent=55 // pred_check
          %p623 = pneg %p216
        $region70: #{tpu_custom_call.1} parent=55 // pred_check_branch
          %625 = sbr.rel (%p623) target = $region72
        $region71: #{tpu_custom_call.1} parent=55 // pred_region
          %s626 = sand.u32 %s26, 1
          %s627 = scalar_lea.sflag [#allocation5], %s626
          %s628 = sand.u32 %s201, 1
          %s629 = scalar_lea.vmem [#allocation6], %s628
          %631 = dma.done %s627, 16
        $region72: #{tpu_custom_call.1} parent=55 // pred_fallthru
          _
      $region56: #{tpu_custom_call.1} parent=5 // pred_fallthru
        _
    $region6: #{tpu_custom_call.1} parent=1 // loop_footer
      %s24 = sadd.s32 1, %s20
    $region7: #{tpu_custom_call.1} parent=1 // loop_footer_branch
      %19 = sbr.rel target = $region3
    $region8: #{tpu_custom_call.1} parent=1 // loop_exit
      _
    %632 = vsyncpa [#allocation3], 1
    %s633 = scalar_lea.sflag [#allocation3], 1
    %634 = vsyncpa %s633, 1
    %635 = vsyncpa [#allocation5], 1
    %s636 = scalar_lea.sflag [#allocation5], 1
    %637 = vsyncpa %s636, 1

</llo_original>
